<compile_context>
chip_gen: v7x
topology: tpu7x:2x2x1
jax: 0.10.0
libtpu: 0.0.40
codegen_flags: <defaults>
</compile_context>

<pallas_src>
import math

import jax
import jax.numpy as jnp
from jax.experimental import pallas as pl
from jax.experimental.pallas import tpu as pltpu


# ------------------------------------------------------------------ helpers

def _round_up(x, m):
    return ((x + m - 1) // m) * m


def _choose_tm(M, row_bytes, vmem_budget=16 * 1024 * 1024):
    """Pick an M-tile: as large as possible, VMEM-safe, >=2 grid steps if we can."""
    cap = max(8, (vmem_budget // 2) // max(row_bytes, 1))  # /2: double buffering
    tm = 8
    for cand in (4096, 2048, 1024, 512, 256, 128, 64, 32, 16, 8):
        if cand <= cap and cand <= max(_round_up(M, 8), 8):
            tm = cand
            break
    # Prefer >= 2 grid steps so v7x can shard the "parallel" M axis over 2 TCs.
    while tm > 8 and pl.cdiv(M, tm) < 2:
        tm //= 2
    return tm


def _extract_patches(x, kh, kw, sh, sw):
    """x: (N, C, H, W) NCHW -> (N*oh*ow, C*kh*kw) in PyTorch conv-weight order."""
    N, C, H, W = x.shape
    oh = (H - kh) // sh + 1
    ow = (W - kw) // sw + 1
    if kh == sh and kw == sw and H == oh * kh and W == ow * kw:
        # Non-overlapping, exactly-covering patches: layout-only reshape/transpose.
        p = x.reshape(N, C, oh, kh, ow, kw)
        p = jnp.transpose(p, (0, 2, 4, 1, 3, 5))            # (N, oh, ow, C, kh, kw)
    else:
        # General fallback (gather) — only hit if stride != kernel.
        rows = jnp.arange(oh)[:, None] * sh + jnp.arange(kh)[None, :]
        cols = jnp.arange(ow)[:, None] * sw + jnp.arange(kw)[None, :]
        p = x[:, :, rows[:, :, None, None], cols[None, None, :, :]]
        p = jnp.transpose(p, (0, 2, 4, 1, 3, 5))            # (N, oh, ow, C, kh, kw)
    return p.reshape(N * oh * ow, C * kh * kw)


# ------------------------------------------------------------------ Pallas kernel

def _make_fused_kernel(n_feats):
    """Kernel: o = bias + sum_i feats_i @ W_i, all inside one grid step."""

    def kernel(*refs):
        feat_refs = refs[:n_feats]
        w_refs = refs[n_feats:2 * n_feats]
        b_ref = refs[2 * n_feats]
        o_ref = refs[2 * n_feats + 1]
        acc = jnp.broadcast_to(b_ref[...].astype(jnp.float32), o_ref.shape)
        for f_ref, w_ref in zip(feat_refs, w_refs):
            acc = acc + jnp.dot(f_ref[...], w_ref[...],
                                preferred_element_type=jnp.float32)
        o_ref[...] = acc.astype(o_ref.dtype)

    return kernel


def fused_concat_matmul(feats, weights, bias, M):
    """out[m, :] = bias + sum_i feats[i][m, :] @ weights[i]  (single Pallas call).

    feats[i]: (M, K_i) f32, weights[i]: (K_i, Np) f32, bias: (1, Np) f32.
    Np is expected to be a multiple of 128 (lane-dense output stores).
    """
    n = len(feats)
    Np = bias.shape[1]
    row_bytes = (sum(f.shape[1] for f in feats) + Np) * 4
    tm = _choose_tm(M, row_bytes)
    M_pad = pl.cdiv(M, tm) * tm
    if M_pad != M:
        feats = [jnp.pad(f, ((0, M_pad - M), (0, 0))) for f in feats]

    in_specs = (
        [pl.BlockSpec((tm, f.shape[1]), lambda i: (i, 0)) for f in feats]
        + [pl.BlockSpec((w.shape[0], Np), lambda i: (0, 0)) for w in weights]
        + [pl.BlockSpec((1, Np), lambda i: (0, 0))]
    )

    out = pl.pallas_call(
        _make_fused_kernel(n),
        out_shape=jax.ShapeDtypeStruct((M_pad, Np), feats[0].dtype),
        grid_spec=pltpu.PrefetchScalarGridSpec(
            num_scalar_prefetch=0,
            grid=(M_pad // tm,),
            in_specs=in_specs,
            out_specs=pl.BlockSpec((tm, Np), lambda i: (i, 0)),
        ),
        compiler_params=pltpu.CompilerParams(
            dimension_semantics=("parallel",),
            vmem_limit_bytes=64 * 1024 * 1024,
        ),
    )(*feats, *weights, bias)
    return out[:M] if M_pad != M else out


# ------------------------------------------------------------------ module

class ScaleMergerPallas:
    """JAX/Pallas port of ScaleMerger with deterministic synthetic weights."""

    def __init__(self, shapes, cout, key):
        min_h = min(h for _, h, _ in shapes)
        min_w = min(w for _, _, w in shapes)
        self.shapes = list(shapes)
        self.min_h, self.min_w = min_h, min_w
        self.cout = cout

        # ---- raw per-layer parameters (exactly mirror the PyTorch module).
        self.prenet_params = []
        self.scale_channels = []
        total_channels = 0
        for (c, h, w) in shapes:
            if h != min_h or w != min_w:
                out_nc = c * int(math.sqrt(w * h / (min_h * min_w)))
                # NOTE: replicates the original module exactly, including its use of
                # shape[1] for both kernel dims (kernel_size=(h//min_h, h//min_w)).
                kh, kw = h // min_h, h // min_w
                sh, sw = h // min_h, w // min_w
                key, k1, k2 = jax.random.split(key, 3)
                fan_in = c * kh * kw
                bound = 1.0 / math.sqrt(fan_in)
                W = jax.random.uniform(k1, (out_nc, c, kh, kw), jnp.float32, -bound, bound)
                B = jax.random.uniform(k2, (out_nc,), jnp.float32, -bound, bound)
                self.prenet_params.append((W, B, kh, kw, sh, sw))
                self.scale_channels.append(out_nc)
                total_channels += out_nc
            else:
                self.prenet_params.append(None)           # nn.Sequential() identity
                self.scale_channels.append(c)
                total_channels += c

        key, k1, k2 = jax.random.split(key, 3)
        bound = 1.0 / math.sqrt(total_channels)
        self.Wout = jax.random.uniform(
            k1, (cout, total_channels, 1, 1), jnp.float32, -bound, bound)
        self.bout = jax.random.uniform(k2, (cout,), jnp.float32, -bound, bound)
        self.total_channels = total_channels

        # ---- fold (prenet conv) -> (1x1 output conv) into one matrix per scale.
        cout_pad = _round_up(max(cout, 128), 128)         # lane-dense output stores
        Wo = self.Wout.reshape(cout, total_channels).T    # (total_channels, cout)
        hi = jax.lax.Precision.HIGHEST
        fused_w = []
        b_fused = self.bout.astype(jnp.float32)
        off = 0
        for params, nc in zip(self.prenet_params, self.scale_channels):
            wo_slice = Wo[off:off + nc]                   # (nc, cout)
            if params is None:
                wf = wo_slice                             # identity scale: (C, cout)
            else:
                W, B = params[0], params[1]
                w1 = W.reshape(W.shape[0], -1)            # (out_nc, C*kh*kw)
                wf = jnp.matmul(w1.T, wo_slice, precision=hi)     # (C*kh*kw, cout)
                b_fused = b_fused + jnp.matmul(B, wo_slice, precision=hi)
            fused_w.append(jnp.pad(wf, ((0, 0), (0, cout_pad - cout))))
            off += nc
        self.fused_w = fused_w
        self.fused_b = jnp.pad(b_fused, (0, cout_pad - cout)).reshape(1, cout_pad)
        self.cout_pad = cout_pad

    # ------------------------------ Pallas forward
    def __call__(self, tensors):
        N = tensors[0].shape[0]
        M = N * self.min_h * self.min_w
        feats = []
        for x, params in zip(tensors, self.prenet_params):
            if params is None:
                n, c, h, w = x.shape
                feats.append(jnp.transpose(x, (0, 2, 3, 1)).reshape(n * h * w, c))
            else:
                _, _, kh, kw, sh, sw = params
                feats.append(_extract_patches(x, kh, kw, sh, sw))
        out = fused_concat_matmul(feats, self.fused_w, self.fused_b, M)  # (M, cout_pad)
        out = out[:, : self.cout].reshape(N, self.min_h, self.min_w, self.cout)
        return jnp.transpose(out, (0, 3, 1, 2))           # back to NCHW

    # ------------------------------ pure-JAX reference (unfused, original path)
    def reference(self, tensors):
        N = tensors[0].shape[0]
        aligned = []
        for x, params in zip(tensors, self.prenet_params):
            if params is None:
                n, c, h, w = x.shape
                aligned.append(jnp.transpose(x, (0, 2, 3, 1)).reshape(n * h * w, c))
            else:
                W, B, kh, kw, sh, sw = params
                patches = _extract_patches(x, kh, kw, sh, sw)       # (M, C*kh*kw)
                aligned.append(patches @ W.reshape(W.shape[0], -1).T + B)
        cat = jnp.concatenate(aligned, axis=1)
        out = cat @ self.Wout.reshape(self.cout, -1).T + self.bout
        out = out.reshape(N, self.min_h, self.min_w, self.cout)
        return jnp.transpose(out, (0, 3, 1, 2))


# ------------------------------------------------------------------ demo

if __name__ == "__main__":
    key = jax.random.PRNGKey(0)

    # Two scales: (C=4, 16x16) gets a strided conv prenet; (C=8, 8x8) is identity.
    shapes = [(4, 16, 16), (8, 8, 8)]
    cout = 16
    batch = 2

    key, km, kx0, kx1 = jax.random.split(key, 4)
    merger = ScaleMergerPallas(shapes, cout, km)

    x0 = jax.random.normal(kx0, (batch,) + tuple(shapes[0]), jnp.float32)
    x1 = jax.random.normal(kx1, (batch,) + tuple(shapes[1]), jnp.float32)

    out = merger([x0, x1])
    out = jax.block_until_ready(out)
    assert out.shape == (batch, cout, merger.min_h, merger.min_w), out.shape

    ref = jax.block_until_ready(merger.reference([x0, x1]))
    # 1e-3 tolerance: fused weights reassociate the f32 channel sum (~1e-6 level).
    assert jnp.allclose(out, ref, atol=1e-3, rtol=1e-3), \
        float(jnp.max(jnp.abs(out - ref)))

    print("KERNEL_OK")
</pallas_src>

<mosaic_0001>
module attributes {stable_mosaic.version = 11 : i64} {
  func.func @kernel(%arg0: i32, %arg1: memref<64x16xf32, #tpu.memory_space<vmem>>, %arg2: memref<64x8xf32, #tpu.memory_space<vmem>>, %arg3: memref<16x128xf32, #tpu.memory_space<vmem>>, %arg4: memref<8x128xf32, #tpu.memory_space<vmem>>, %arg5: memref<1x128xf32, #tpu.memory_space<vmem>>, %arg6: memref<64x128xf32, #tpu.memory_space<vmem>>) attributes {dimension_semantics = [#tpu.dimension_semantics<parallel>], iteration_bounds = array<i64: 2>, scalar_prefetch = 0 : i64, scratch_operands = 0 : i64, tpu.core_type = #tpu.core_type<tc>, window_params = [{transform_indices = @transform_0, window_bounds = array<i64: 64, 16>}, {transform_indices = @transform_1, window_bounds = array<i64: 64, 8>}, {pipeline_mode = #tpu.pipeline_mode<synchronous>, transform_indices = @transform_2, window_bounds = array<i64: 16, 128>}, {pipeline_mode = #tpu.pipeline_mode<synchronous>, transform_indices = @transform_3, window_bounds = array<i64: 8, 128>}, {pipeline_mode = #tpu.pipeline_mode<synchronous>, transform_indices = @transform_4, window_bounds = array<i64: 1, 128>}, {transform_indices = @transform_5, window_bounds = array<i64: 64, 128>}]} {
    %c0 = arith.constant 0 : index
    %c0_0 = arith.constant 0 : index
    %0 = vector.load %arg5[%c0, %c0_0] : memref<1x128xf32, #tpu.memory_space<vmem>>, vector<1x128xf32>
    %1 = vector.shape_cast %0 : vector<1x128xf32> to vector<1x128xf32>
    %2 = vector.broadcast %1 : vector<1x128xf32> to vector<64x128xf32>
    %c0_1 = arith.constant 0 : index
    %c0_2 = arith.constant 0 : index
    %3 = vector.load %arg1[%c0_1, %c0_2] : memref<64x16xf32, #tpu.memory_space<vmem>>, vector<64x16xf32>
    %c0_3 = arith.constant 0 : index
    %c0_4 = arith.constant 0 : index
    %4 = vector.load %arg3[%c0_3, %c0_4] : memref<16x128xf32, #tpu.memory_space<vmem>>, vector<16x128xf32>
    %cst = arith.constant dense<0.000000e+00> : vector<64x128xf32>
    %5 = tpu.matmul %3, %4, %cst {dimension_numbers = #tpu.dot_dimension_numbers<[1], [0], [0], [1], [0, 0, 1, 1], [], []>} : vector<64x16xf32>, vector<16x128xf32>, vector<64x128xf32> -> vector<64x128xf32>
    %6 = arith.addf %2, %5 : vector<64x128xf32>
    %c0_5 = arith.constant 0 : index
    %c0_6 = arith.constant 0 : index
    %7 = vector.load %arg2[%c0_5, %c0_6] : memref<64x8xf32, #tpu.memory_space<vmem>>, vector<64x8xf32>
    %c0_7 = arith.constant 0 : index
    %c0_8 = arith.constant 0 : index
    %8 = vector.load %arg4[%c0_7, %c0_8] : memref<8x128xf32, #tpu.memory_space<vmem>>, vector<8x128xf32>
    %cst_9 = arith.constant dense<0.000000e+00> : vector<64x128xf32>
    %9 = tpu.matmul %7, %8, %cst_9 {dimension_numbers = #tpu.dot_dimension_numbers<[1], [0], [0], [1], [0, 0, 1, 1], [], []>} : vector<64x8xf32>, vector<8x128xf32>, vector<64x128xf32> -> vector<64x128xf32>
    %10 = arith.addf %6, %9 : vector<64x128xf32>
    %c0_10 = arith.constant 0 : index
    %c0_11 = arith.constant 0 : index
    %11 = vector.load %arg6[%c0_10, %c0_11] : memref<64x128xf32, #tpu.memory_space<vmem>>, vector<64x128xf32>
    tpu.vector_store %arg6[%c0_10, %c0_11], %10 {strides = array<i32>} : memref<64x128xf32, #tpu.memory_space<vmem>>, vector<64x128xf32>,
    return
  }
  func.func @transform_0(%arg0: i32) -> (i32, i32) {
    %c0_i32 = arith.constant 0 : i32
    %c0_i32_0 = arith.constant 0 : i32
    return %arg0, %c0_i32 : i32, i32
  }
  func.func @transform_1(%arg0: i32) -> (i32, i32) {
    %c0_i32 = arith.constant 0 : i32
    %c0_i32_0 = arith.constant 0 : i32
    return %arg0, %c0_i32 : i32, i32
  }
  func.func @transform_2(%arg0: i32) -> (i32, i32) {
    %c0_i32 = arith.constant 0 : i32
    %c0_i32_0 = arith.constant 0 : i32
    %c0_i32_1 = arith.constant 0 : i32
    return %c0_i32, %c0_i32_0 : i32, i32
  }
  func.func @transform_3(%arg0: i32) -> (i32, i32) {
    %c0_i32 = arith.constant 0 : i32
    %c0_i32_0 = arith.constant 0 : i32
    %c0_i32_1 = arith.constant 0 : i32
    return %c0_i32, %c0_i32_0 : i32, i32
  }
  func.func @transform_4(%arg0: i32) -> (i32, i32) {
    %c0_i32 = arith.constant 0 : i32
    %c0_i32_0 = arith.constant 0 : i32
    %c0_i32_1 = arith.constant 0 : i32
    return %c0_i32, %c0_i32_0 : i32, i32
  }
  func.func @transform_5(%arg0: i32) -> (i32, i32) {
    %c0_i32 = arith.constant 0 : i32
    %c0_i32_0 = arith.constant 0 : i32
    return %arg0, %c0_i32 : i32, i32
  }
}

</mosaic_0001>

<llo_original>
// kernel: tpu_custom_call.1
$region0: #{tpu_custom_call.1}
  #allocation0 [shape = 'u32[]', space=smem, size = 0x4, offset = 0x4, fixed_abs, tag = 'smem constant byte address 0x4 - core index']
  #allocation1 [shape = 'u32[144,128]{1,0:T(1,128)}', space=vmem, size = 0x12000, scoped, tag = 'internal scratch']
  %s0 = inlined_call_operand.hbm [shape: f32[128,16], index: 0, kind: input, shape index: {}]
  %s1 = inlined_call_operand.hbm [shape: f32[128,8], index: 1, kind: input, shape index: {}]
  %s2 = inlined_call_operand.hbm [shape: f32[16,128], index: 2, kind: input, shape index: {}]
  %s3 = inlined_call_operand.hbm [shape: f32[8,128], index: 3, kind: input, shape index: {}]
  %s4 = inlined_call_operand.hbm [shape: f32[1,128], index: 4, kind: input, shape index: {}]
  %s5 = inlined_call_operand.hbm [shape: f32[128,128], index: 5, kind: output, shape index: {}]
  %s6 = sld [smem:[#allocation0]]
  $region73: #{tpu_custom_call.1} parent=0
    _
  %s8 = ssub.s32 1, %s6
  %s9 = scalar_select 0, %s8, %s6
  $region1: #{tpu_custom_call.1} parent=0
    #allocation2 [shape = 'u8[65536]{0}', space=vmem, size = 0x10000, scoped, tag = 'input window, operand 0']
    #allocation3 [shape = 's32[2]{0}', space=sflag, size = 0x8, scoped, tag = 'scoped memory for tpu_custom_call.1']
    #allocation4 [shape = 's32[2]{0}', space=sflag, size = 0x8, scoped, tag = 'scoped memory for tpu_custom_call.1']
    #allocation5 [shape = 'u8[65536]{0}', space=vmem, size = 0x10000, scoped, tag = 'input window, operand 1']
    #allocation6 [shape = 's32[2]{0}', space=sflag, size = 0x8, scoped, tag = 'scoped memory for tpu_custom_call.1']
    #allocation7 [shape = 'u8[8192]{0}', space=vmem, size = 0x2000, scoped, tag = 'input window, operand 2, single buffered']
    #allocation8 [shape = 'u8[4096]{0}', space=vmem, size = 0x1000, scoped, tag = 'input window, operand 3, single buffered']
    #allocation9 [shape = 's32[1]{0}', space=sflag, size = 0x4, scoped, tag = 'scoped memory for tpu_custom_call.1']
    #allocation10 [shape = 'u8[512]{0}', space=vmem, size = 0x400, scoped, tag = 'input window, operand 4, single buffered']
    #allocation11 [shape = 'u8[65536]{0}', space=vmem, size = 0x10000, scoped, tag = 'output window, operand 0']
    %10 = vsyncpa [#allocation3], 0
    %s11 = scalar_lea.sflag [#allocation3], 1
    %12 = vsyncpa %s11, 0
    %13 = vsyncpa [#allocation6], 0
    %s14 = scalar_lea.sflag [#allocation6], 1
    %15 = vsyncpa %s14, 0
    %16 = vsyncpa [#allocation9], 0
    %17 = vsyncpa [#allocation4], 0
    %s18 = scalar_lea.sflag [#allocation4], 1
    %19 = vsyncpa %s18, 0
    loop: start=0, step=1, limit=4
    $region2: #{tpu_custom_call.1} parent=1 // loop_pre_header
      _
    $region3: #{tpu_custom_call.1} parent=1 // loop_header
      %s21 = sphi 0, %s25
      %p22 = scmp.ge.s32.totalorder %s21, 4
      %s31 = sphi 0, %s33
      %s34 = sphi 0, %s31
      %s35 = sphi 0, %s34
      %s51 = sphi 0, %s35
      %s57 = sphi 0, %s59
      %s60 = sphi 0, %s57
      %s61 = sphi 0, %s60
      %s77 = sphi 0, %s61
      %s81 = sphi 0, %s81
      %s83 = sphi 0, %s81
      %s84 = sphi 0, %s83
      %s98 = sphi 0, %s84
      %s102 = sphi 0, %s102
      %s104 = sphi 0, %s102
      %s105 = sphi 0, %s104
      %s119 = sphi 0, %s105
      %s123 = sphi 0, %s123
      %s125 = sphi 0, %s123
      %s126 = sphi 0, %s125
      %s140 = sphi 0, %s126
      %s146 = sphi 0, %s148
      %s149 = sphi 0, %s146
      %s150 = sphi 0, %s149
      %s166 = sphi 0, %s150
    $region4: #{tpu_custom_call.1} parent=1 // loop_header_branch
      %24 = sbr.rel (%p22) target = $region8
    $region5: #{tpu_custom_call.1} parent=1 // loop_body
      %s26 = ssub.s32 %s21, 1
      %s27 = ssub.s32 %s21, 2
      %s28 = sadd.s32 %s21, 1
      %s29 = ssub.s32 %s21, %s28
      %p30 = scmp.eq.s32.totalorder %s29, 0
      %s32 = sadd.s32 %s31, 1
      %s33 = scalar_select %p30, %s31, %s32
      %p36 = pneg %p30
      %p37 = scmp.eq.s32.totalorder %s21, 1
      %p38 = por %p36, %p37
      %p39 = scmp.ne.s32.totalorder %s31, %s34
      %p40 = scmp.eq.s32.totalorder %s21, 0
      %p41 = por %p39, %p40
      %p42 = scmp.ne.s32.totalorder %s31, %s34
      %p43 = scmp.eq.s32.totalorder %s26, 1
      %p44 = por %p42, %p43
      %p45 = scmp.ne.s32.totalorder %s34, %s35
      %p46 = scmp.eq.s32.totalorder %s26, 0
      %p47 = por %p45, %p46
      %p48 = scmp.ne.s32.totalorder %s34, %s35
      %p49 = scmp.eq.s32.totalorder %s27, 1
      %p50 = por %p48, %p49
      %p52 = scmp.ne.s32.totalorder %s35, %s51
      %p53 = scmp.eq.s32.totalorder %s27, 0
      %p54 = por %p52, %p53
      %s55 = ssub.s32 %s21, %s28
      %p56 = scmp.eq.s32.totalorder %s55, 0
      %s58 = sadd.s32 %s57, 1
      %s59 = scalar_select %p56, %s57, %s58
      %p62 = pneg %p56
      %p63 = scmp.eq.s32.totalorder %s21, 1
      %p64 = por %p62, %p63
      %p65 = scmp.ne.s32.totalorder %s57, %s60
      %p66 = scmp.eq.s32.totalorder %s21, 0
      %p67 = por %p65, %p66
      %p68 = scmp.ne.s32.totalorder %s57, %s60
      %p69 = scmp.eq.s32.totalorder %s26, 1
      %p70 = por %p68, %p69
      %p71 = scmp.ne.s32.totalorder %s60, %s61
      %p72 = scmp.eq.s32.totalorder %s26, 0
      %p73 = por %p71, %p72
      %p74 = scmp.ne.s32.totalorder %s60, %s61
      %p75 = scmp.eq.s32.totalorder %s27, 1
      %p76 = por %p74, %p75
      %p78 = scmp.ne.s32.totalorder %s61, %s77
      %p79 = scmp.eq.s32.totalorder %s27, 0
      %p80 = por %p78, %p79
      %s82 = sadd.s32 %s81, 1
      %p85 = scmp.eq.s32.totalorder %s21, 1
      %p86 = scmp.ne.s32.totalorder %s81, %s83
      %p87 = scmp.eq.s32.totalorder %s21, 0
      %p88 = por %p86, %p87
      %p89 = scmp.ne.s32.totalorder %s81, %s83
      %p90 = scmp.eq.s32.totalorder %s26, 1
      %p91 = por %p89, %p90
      %p92 = scmp.ne.s32.totalorder %s83, %s84
      %p93 = scmp.eq.s32.totalorder %s26, 0
      %p94 = por %p92, %p93
      %p95 = scmp.ne.s32.totalorder %s83, %s84
      %p96 = scmp.eq.s32.totalorder %s27, 1
      %p97 = por %p95, %p96
      %p99 = scmp.ne.s32.totalorder %s84, %s98
      %p100 = scmp.eq.s32.totalorder %s27, 0
      %p101 = por %p99, %p100
      %s103 = sadd.s32 %s102, 1
      %p106 = scmp.eq.s32.totalorder %s21, 1
      %p107 = scmp.ne.s32.totalorder %s102, %s104
      %p108 = scmp.eq.s32.totalorder %s21, 0
      %p109 = por %p107, %p108
      %p110 = scmp.ne.s32.totalorder %s102, %s104
      %p111 = scmp.eq.s32.totalorder %s26, 1
      %p112 = por %p110, %p111
      %p113 = scmp.ne.s32.totalorder %s104, %s105
      %p114 = scmp.eq.s32.totalorder %s26, 0
      %p115 = por %p113, %p114
      %p116 = scmp.ne.s32.totalorder %s104, %s105
      %p117 = scmp.eq.s32.totalorder %s27, 1
      %p118 = por %p116, %p117
      %p120 = scmp.ne.s32.totalorder %s105, %s119
      %p121 = scmp.eq.s32.totalorder %s27, 0
      %p122 = por %p120, %p121
      %s124 = sadd.s32 %s123, 1
      %p127 = scmp.eq.s32.totalorder %s21, 1
      %p128 = scmp.ne.s32.totalorder %s123, %s125
      %p129 = scmp.eq.s32.totalorder %s21, 0
      %p130 = por %p128, %p129
      %p131 = scmp.ne.s32.totalorder %s123, %s125
      %p132 = scmp.eq.s32.totalorder %s26, 1
      %p133 = por %p131, %p132
      %p134 = scmp.ne.s32.totalorder %s125, %s126
      %p135 = scmp.eq.s32.totalorder %s26, 0
      %p136 = por %p134, %p135
      %p137 = scmp.ne.s32.totalorder %s125, %s126
      %p138 = scmp.eq.s32.totalorder %s27, 1
      %p139 = por %p137, %p138
      %p141 = scmp.ne.s32.totalorder %s126, %s140
      %p142 = scmp.eq.s32.totalorder %s27, 0
      %p143 = por %p141, %p142
      %s144 = ssub.s32 %s21, %s28
      %p145 = scmp.eq.s32.totalorder %s144, 0
      %s147 = sadd.s32 %s146, 1
      %s148 = scalar_select %p145, %s146, %s147
      %p151 = pneg %p145
      %p152 = scmp.eq.s32.totalorder %s21, 1
      %p153 = por %p151, %p152
      %p154 = scmp.ne.s32.totalorder %s146, %s149
      %p155 = scmp.eq.s32.totalorder %s21, 0
      %p156 = por %p154, %p155
      %p157 = scmp.ne.s32.totalorder %s146, %s149
      %p158 = scmp.eq.s32.totalorder %s26, 1
      %p159 = por %p157, %p158
      %p160 = scmp.ne.s32.totalorder %s149, %s150
      %p161 = scmp.eq.s32.totalorder %s26, 0
      %p162 = por %p160, %p161
      %p163 = scmp.ne.s32.totalorder %s149, %s150
      %p164 = scmp.eq.s32.totalorder %s27, 1
      %p165 = por %p163, %p164
      %p167 = scmp.ne.s32.totalorder %s150, %s166
      %p168 = scmp.eq.s32.totalorder %s27, 0
      %p169 = por %p167, %p168
      %p170 = scmp.le.s32.totalorder 1, %s21
      %p171 = scmp.lt.s32.totalorder %s21, 3
      %p172 = pnand %p170, %p171
      %p173 = pneg %p172
      // Predicated region
      $region9: #{tpu_custom_call.1} parent=5 // pred_check
        _
      $region10: #{tpu_custom_call.1} parent=5 // pred_check_branch
        %175 = sbr.rel (%p172) target = $region12
      $region11: #{tpu_custom_call.1} parent=5 // pred_region
        %s176 = ssub.s32 %s21, 1
        // Predicated region
        $region13: #{tpu_custom_call.1} parent=11 // pred_check
          %p177 = pneg %p94
        $region14: #{tpu_custom_call.1} parent=11 // pred_check_branch
          %179 = sbr.rel (%p177) target = $region16
        $region15: #{tpu_custom_call.1} parent=11 // pred_region
          %s181 = ssub.s32 256, 256
          %182 = vsyncadd [#allocation6], %s181
          %s183 = sshll.u32 [#allocation7], 4
          %s184 = int_to_ptr.vmem [resolvable:$true] %s183
          %189 = dma.hbm_to_vmem [thread:$0]  %s2, 256, %s184, [#allocation6], 128, 128, 8
        $region16: #{tpu_custom_call.1} parent=11 // pred_fallthru
          _
        // Predicated region
        $region17: #{tpu_custom_call.1} parent=11 // pred_check
          %p190 = pneg %p115
        $region18: #{tpu_custom_call.1} parent=11 // pred_check_branch
          %192 = sbr.rel (%p190) target = $region20
        $region19: #{tpu_custom_call.1} parent=11 // pred_region
          %s194 = ssub.s32 128, 128
          %195 = vsyncadd [#allocation9], %s194
          %s197 = sshll.u32 [#allocation8], 4
          %s198 = int_to_ptr.vmem [resolvable:$true] %s197
          %200 = dma.hbm_to_vmem [thread:$0]  %s3, 128, %s198, [#allocation9]
        $region20: #{tpu_custom_call.1} parent=11 // pred_fallthru
          _
        // Predicated region
        $region21: #{tpu_custom_call.1} parent=11 // pred_check
          %p201 = pneg %p136
        $region22: #{tpu_custom_call.1} parent=11 // pred_check_branch
          %203 = sbr.rel (%p201) target = $region24
        $region23: #{tpu_custom_call.1} parent=11 // pred_region
          %s205 = ssub.s32 16, 16
          %206 = vsyncadd [#allocation9], %s205
          %s208 = sshll.u32 [#allocation10], 4
          %s209 = int_to_ptr.vmem [resolvable:$true] %s208
          %211 = dma.hbm_to_vmem [thread:$0]  %s4, 16, %s209, [#allocation9]
        $region24: #{tpu_custom_call.1} parent=11 // pred_fallthru
          _
      $region12: #{tpu_custom_call.1} parent=5 // pred_fallthru
        _
      %p212 = scmp.lt.s32.totalorder %s21, 2
      // Predicated region
      $region25: #{tpu_custom_call.1} parent=5 // pred_check
        %p213 = pneg %p212
      $region26: #{tpu_custom_call.1} parent=5 // pred_check_branch
        %215 = sbr.rel (%p213) target = $region28
      $region27: #{tpu_custom_call.1} parent=5 // pred_region
        // Predicated region
        $region29: #{tpu_custom_call.1} parent=27 // pred_check
          %p216 = pneg %p41
        $region30: #{tpu_custom_call.1} parent=27 // pred_check_branch
          %218 = sbr.rel (%p216) target = $region32
        $region31: #{tpu_custom_call.1} parent=27 // pred_region
          %s219 = sand.u32 %s31, 1
          %s220 = scalar_lea.sflag [#allocation3], %s219
          %s221 = sand.u32 %s31, 1
          %s222 = smul.addr %s221, 64
          %s223 = scalar_lea.vmem [#allocation2], %s222
          %s224 = smul.u32 8, %s21
          %s226 = ssub.s32 1024, 1024
          %227 = vsyncadd %s220, %s226
          %s228 = smul.addr %s224, 128
          %s229 = scalar_lea.hbm %s0, %s228
          %s230 = sshll.u32 %s223, 4
          %s231 = int_to_ptr.vmem [resolvable:$true] %s230
          %236 = dma.hbm_to_vmem [thread:$0]  %s229, 1024, %s231, %s220, 128, 128, 8
        $region32: #{tpu_custom_call.1} parent=27 // pred_fallthru
          _
        // Predicated region
        $region33: #{tpu_custom_call.1} parent=27 // pred_check
          %p237 = pneg %p67
        $region34: #{tpu_custom_call.1} parent=27 // pred_check_branch
          %239 = sbr.rel (%p237) target = $region36
        $region35: #{tpu_custom_call.1} parent=27 // pred_region
          %s240 = sand.u32 %s21, 1
          %s241 = scalar_lea.sflag [#allocation6], %s240
          %s242 = sand.u32 %s57, 1
          %s243 = smul.addr %s242, 64
          %s244 = scalar_lea.vmem [#allocation5], %s243
          %s245 = smul.u32 8, %s21
          %s247 = ssub.s32 1024, 1024
          %248 = vsyncadd %s241, %s247
          %s249 = smul.addr %s245, 128
          %s250 = scalar_lea.hbm %s1, %s249
          %s251 = sshll.u32 %s244, 4
          %s252 = int_to_ptr.vmem [resolvable:$true] %s251
          %257 = dma.hbm_to_vmem [thread:$0]  %s250, 1024, %s252, %s241, 128, 128, 8
        $region36: #{tpu_custom_call.1} parent=27 // pred_fallthru
          _
      $region28: #{tpu_custom_call.1} parent=5 // pred_fallthru
        _
      %p258 = scmp.le.s32.totalorder 1, %s21
      %p259 = scmp.lt.s32.totalorder %s21, 3
      %p260 = pnand %p258, %p259
      %p261 = pneg %p260
      // Predicated region
      $region37: #{tpu_custom_call.1} parent=5 // pred_check
        _
      $region38: #{tpu_custom_call.1} parent=5 // pred_check_branch
        %263 = sbr.rel (%p260) target = $region40
      $region39: #{tpu_custom_call.1} parent=5 // pred_region
        %s264 = ssub.s32 %s21, 1
        %s265 = sand.u32 %s34, 1
        %s266 = scalar_lea.sflag [#allocation3], %s265
        %s267 = sand.u32 %s34, 1
        %s268 = smul.addr %s267, 64
        %s269 = scalar_lea.vmem [#allocation2], %s268
        // Predicated region
        $region41: #{tpu_custom_call.1} parent=39 // pred_check
          %p270 = pneg %p47
        $region42: #{tpu_custom_call.1} parent=39 // pred_check_branch
          %272 = sbr.rel (%p270) target = $region44
        $region43: #{tpu_custom_call.1} parent=39 // pred_region
          %273 = dma.done %s266, 1024
        $region44: #{tpu_custom_call.1} parent=39 // pred_fallthru
          _
        %s274 = sand.u32 %s26, 1
        %s275 = scalar_lea.sflag [#allocation6], %s274
        %s276 = sand.u32 %s60, 1
        %s277 = smul.addr %s276, 64
        %s278 = scalar_lea.vmem [#allocation5], %s277
        // Predicated region
        $region45: #{tpu_custom_call.1} parent=39 // pred_check
          %p279 = pneg %p73
        $region46: #{tpu_custom_call.1} parent=39 // pred_check_branch
          %281 = sbr.rel (%p279) target = $region48
        $region47: #{tpu_custom_call.1} parent=39 // pred_region
          %282 = dma.done %s275, 1024
        $region48: #{tpu_custom_call.1} parent=39 // pred_fallthru
          _
        // Predicated region
        $region49: #{tpu_custom_call.1} parent=39 // pred_check
          %p283 = pneg %p94
        $region50: #{tpu_custom_call.1} parent=39 // pred_check_branch
          %285 = sbr.rel (%p283) target = $region52
        $region51: #{tpu_custom_call.1} parent=39 // pred_region
          %286 = dma.done [#allocation6], 256
        $region52: #{tpu_custom_call.1} parent=39 // pred_fallthru
          _
        // Predicated region
        $region53: #{tpu_custom_call.1} parent=39 // pred_check
          %p287 = pneg %p115
        $region54: #{tpu_custom_call.1} parent=39 // pred_check_branch
          %289 = sbr.rel (%p287) target = $region56
        $region55: #{tpu_custom_call.1} parent=39 // pred_region
          %290 = dma.done [#allocation9], 128
        $region56: #{tpu_custom_call.1} parent=39 // pred_fallthru
          _
        // Predicated region
        $region57: #{tpu_custom_call.1} parent=39 // pred_check
          %p291 = pneg %p136
        $region58: #{tpu_custom_call.1} parent=39 // pred_check_branch
          %293 = sbr.rel (%p291) target = $region60
        $region59: #{tpu_custom_call.1} parent=39 // pred_region
          %294 = dma.done [#allocation9], 16
        $region60: #{tpu_custom_call.1} parent=39 // pred_fallthru
          _
        %s295 = sand.u32 %s34, 1
        %s296 = scalar_lea.sflag [#allocation3], %s295
        %s297 = sand.u32 %s34, 1
        %s298 = smul.addr %s297, 64
        %s299 = scalar_lea.vmem [#allocation2], %s298
        %p300 = pneg %p47
        %p301 = pneg %p44
        %s302 = sand.u32 %s26, 1
        %s303 = scalar_lea.sflag [#allocation6], %s302
        %s304 = sand.u32 %s60, 1
        %s305 = smul.addr %s304, 64
        %s306 = scalar_lea.vmem [#allocation5], %s305
        %p307 = pneg %p73
        %p308 = pneg %p70
        %p309 = pneg %p94
        %p310 = pneg %p91
        %p311 = pneg %p115
        %p312 = pneg %p112
        %p313 = pneg %p136
        %p314 = pneg %p133
        %p315 = pneg %p162
        %p316 = pneg %p159
        %s317 = sand.u32 %s149, 1
        %s318 = scalar_lea.sflag [#allocation4], %s317
        %s319 = sand.u32 %s149, 1
        %s320 = smul.addr %s319, 64
        %s321 = scalar_lea.vmem [#allocation11], %s320
        %s322 = smul.u32 8, %s26
        %s323 = smul.u32 8, %s26
        %s324 = smul.u32 8, %s26
        %v325 = vld [vmem:[#allocation10] sm:$0x1]
        %v327 = vlaneseq
        %v328 = vshrl.u32 %v327, 7
        %v329 = vsub.s32 0, %v328
        %v330 = vrot.slane %v325, %v329
        %v332 = vld [vmem:[%s269] sm:$0xff]
        %v333 = vld [vmem:[%s269 + $0x8] sm:$0xff]
        %v334 = vld [vmem:[%s269 + $0x10] sm:$0xff]
        %v335 = vld [vmem:[%s269 + $0x18] sm:$0xff]
        %v336 = vld [vmem:[%s269 + $0x20] sm:$0xff]
        %v337 = vld [vmem:[%s269 + $0x28] sm:$0xff]
        %v338 = vld [vmem:[%s269 + $0x30] sm:$0xff]
        %v339 = vld [vmem:[%s269 + $0x38] sm:$0xff]
        %v340 = vld [vmem:[#allocation7] sm:$0xff]
        %v341 = vld [vmem:[#allocation7 + $0x8] sm:$0xff]
        %vm342 = vcmask 130048
        %v344 = vsel %vm342, %v332, 0
        %v347 = vsel %vm342, %v333, 0
        %v350 = vsel %vm342, %v334, 0
        %v353 = vsel %vm342, %v335, 0
        %v356 = vsel %vm342, %v336, 0
        %v359 = vsel %vm342, %v337, 0
        %v362 = vsel %vm342, %v338, 0
        %v365 = vsel %vm342, %v339, 0
        %367 = vmatprep.subr.mxu0 0.0
        %368 = vmatpush1.msra.mxu0 %v340
        %369 = vmatprep.subr.mxu0 0.0
        %370 = vmatpush1.msra.mxu0 %v341
        %371 = vmatprep.subr.mxu0 0.0
        %372 = vmatpush1.msra.mxu0 0.0
        %373 = vmatprep.subr.mxu0 0.0
        %374 = vmatpush1.msra.mxu0 0.0
        %375 = vmatprep.subr.mxu0 0.0
        %376 = vmatpush1.msra.mxu0 0.0
        %377 = vmatprep.subr.mxu0 0.0
        %378 = vmatpush1.msra.mxu0 0.0
        %379 = vmatprep.subr.mxu0 0.0
        %380 = vmatpush1.msra.mxu0 0.0
        %381 = vmatprep.subr.mxu0 0.0
        %382 = vmatpush1.msra.mxu0 0.0
        %383 = vmatprep.subr.mxu0 0.0
        %384 = vmatpush1.msra.mxu0 0.0
        %385 = vmatprep.subr.mxu0 0.0
        %386 = vmatpush1.msra.mxu0 0.0
        %387 = vmatprep.subr.mxu0 0.0
        %388 = vmatpush1.msra.mxu0 0.0
        %389 = vmatprep.subr.mxu0 0.0
        %390 = vmatpush1.msra.mxu0 0.0
        %391 = vmatprep.subr.mxu0 0.0
        %392 = vmatpush1.msra.mxu0 0.0
        %393 = vmatprep.subr.mxu0 0.0
        %394 = vmatpush1.msra.mxu0 0.0
        %395 = vmatprep.subr.mxu0 0.0
        %396 = vmatpush1.msra.mxu0 0.0
        %397 = vmatprep.subr.mxu0 0.0
        %398 = vmatpush1.msra.mxu0 0.0
        %399 = vmatprep.subr.mxu0 0.0
        %400 = vmatpush1.msra.mxu0 0.0
        %401 = vmatprep.subr.mxu0 0.0
        %402 = vmatpush1.msra.mxu0 0.0
        %403 = vmatprep.subr.mxu0 0.0
        %404 = vmatpush1.msra.mxu0 0.0
        %405 = vmatprep.subr.mxu0 0.0
        %406 = vmatpush1.msra.mxu0 0.0
        %407 = vmatprep.subr.mxu0 0.0
        %408 = vmatpush1.msra.mxu0 0.0
        %409 = vmatprep.subr.mxu0 0.0
        %410 = vmatpush1.msra.mxu0 0.0
        %411 = vmatprep.subr.mxu0 0.0
        %412 = vmatpush1.msra.mxu0 0.0
        %413 = vmatprep.subr.mxu0 0.0
        %414 = vmatpush1.msra.mxu0 0.0
        %415 = vmatprep.subr.mxu0 0.0
        %416 = vmatpush1.msra.mxu0 0.0
        %417 = vmatprep.subr.mxu0 0.0
        %418 = vmatpush1.msra.mxu0 0.0
        %419 = vmatprep.subr.mxu0 0.0
        %420 = vmatpush1.msra.mxu0 0.0
        %421 = vmatprep.subr.mxu0 0.0
        %422 = vmatpush1.msra.mxu0 0.0
        %423 = vmatprep.subr.mxu0 0.0
        %424 = vmatpush1.msra.mxu0 0.0
        %425 = vmatprep.subr.mxu0 0.0
        %426 = vmatpush1.msra.mxu0 0.0
        %427 = vmatprep.subr.mxu0 0.0
        %428 = vmatpush1.msra.mxu0 0.0
        %429 = vmatprep.subr.mxu0 0.0
        %430 = vmatpush1.msra.mxu0 0.0
        %431 = vmatprep.mubr.f32.mxu0 0.0
        %432 = vmatmul.mubr.f32.gmra.mrb[0].mxu0 %v344
        %v433 = vpop.f32.mrb[0].mxu0
        %v434 = vadd.f32 0.0, %v433
        %v435 = vpop.f32.mrb[0].mxu0
        %436 = vmatprep.mubr.f32.mxu0 0.0
        %437 = vmatmul.mubr.f32.gmra.mrb[0].mxu0 %v347
        %v438 = vpop.f32.mrb[0].mxu0
        %v439 = vadd.f32 0.0, %v438
        %v440 = vpop.f32.mrb[0].mxu0
        %441 = vmatprep.mubr.f32.mxu0 0.0
        %442 = vmatmul.mubr.f32.gmra.mrb[0].mxu0 %v350
        %v443 = vpop.f32.mrb[0].mxu0
        %v444 = vadd.f32 0.0, %v443
        %v445 = vpop.f32.mrb[0].mxu0
        %446 = vmatprep.mubr.f32.mxu0 0.0
        %447 = vmatmul.mubr.f32.gmra.mrb[0].mxu0 %v353
        %v448 = vpop.f32.mrb[0].mxu0
        %v449 = vadd.f32 0.0, %v448
        %v450 = vpop.f32.mrb[0].mxu0
        %451 = vmatprep.mubr.f32.mxu0 0.0
        %452 = vmatmul.mubr.f32.gmra.mrb[0].mxu0 %v356
        %v453 = vpop.f32.mrb[0].mxu0
        %v454 = vadd.f32 0.0, %v453
        %v455 = vpop.f32.mrb[0].mxu0
        %456 = vmatprep.mubr.f32.mxu0 0.0
        %457 = vmatmul.mubr.f32.gmra.mrb[0].mxu0 %v359
        %v458 = vpop.f32.mrb[0].mxu0
        %v459 = vadd.f32 0.0, %v458
        %v460 = vpop.f32.mrb[0].mxu0
        %461 = vmatprep.mubr.f32.mxu0 0.0
        %462 = vmatmul.mubr.f32.gmra.mrb[0].mxu0 %v362
        %v463 = vpop.f32.mrb[0].mxu0
        %v464 = vadd.f32 0.0, %v463
        %v465 = vpop.f32.mrb[0].mxu0
        %466 = vmatprep.mubr.f32.mxu0 0.0
        %467 = vmatmul.mubr.f32.gmra.mrb[0].mxu0 %v365
        %v468 = vpop.f32.mrb[0].mxu0
        %v469 = vadd.f32 0.0, %v468
        %v470 = vpop.f32.mrb[0].mxu0
        %471 = vdwg.mxu0
        %v472 = vadd.f32 %v330, %v434
        %v473 = vadd.f32 %v330, %v439
        %v474 = vadd.f32 %v330, %v444
        %v475 = vadd.f32 %v330, %v449
        %v476 = vadd.f32 %v330, %v454
        %v477 = vadd.f32 %v330, %v459
        %v478 = vadd.f32 %v330, %v464
        %v479 = vadd.f32 %v330, %v469
        %v480 = vld [vmem:[%s278] sm:$0xff]
        %v481 = vld [vmem:[%s278 + $0x8] sm:$0xff]
        %v482 = vld [vmem:[%s278 + $0x10] sm:$0xff]
        %v483 = vld [vmem:[%s278 + $0x18] sm:$0xff]
        %v484 = vld [vmem:[%s278 + $0x20] sm:$0xff]
        %v485 = vld [vmem:[%s278 + $0x28] sm:$0xff]
        %v486 = vld [vmem:[%s278 + $0x30] sm:$0xff]
        %v487 = vld [vmem:[%s278 + $0x38] sm:$0xff]
        %v488 = vld [vmem:[#allocation8] sm:$0xff]
        %vm489 = vcmask 64512
        %v491 = vsel %vm489, %v480, 0
        %v494 = vsel %vm489, %v481, 0
        %v497 = vsel %vm489, %v482, 0
        %v500 = vsel %vm489, %v483, 0
        %v503 = vsel %vm489, %v484, 0
        %v506 = vsel %vm489, %v485, 0
        %v509 = vsel %vm489, %v486, 0
        %v512 = vsel %vm489, %v487, 0
        %514 = vmatprep.subr.mxu0 0.0
        %515 = vmatpush1.msra.mxu0 %v488
        %516 = vmatprep.subr.mxu0 0.0
        %517 = vmatpush1.msra.mxu0 0.0
        %518 = vmatprep.subr.mxu0 0.0
        %519 = vmatpush1.msra.mxu0 0.0
        %520 = vmatprep.subr.mxu0 0.0
        %521 = vmatpush1.msra.mxu0 0.0
        %522 = vmatprep.subr.mxu0 0.0
        %523 = vmatpush1.msra.mxu0 0.0
        %524 = vmatprep.subr.mxu0 0.0
        %525 = vmatpush1.msra.mxu0 0.0
        %526 = vmatprep.subr.mxu0 0.0
        %527 = vmatpush1.msra.mxu0 0.0
        %528 = vmatprep.subr.mxu0 0.0
        %529 = vmatpush1.msra.mxu0 0.0
        %530 = vmatprep.subr.mxu0 0.0
        %531 = vmatpush1.msra.mxu0 0.0
        %532 = vmatprep.subr.mxu0 0.0
        %533 = vmatpush1.msra.mxu0 0.0
        %534 = vmatprep.subr.mxu0 0.0
        %535 = vmatpush1.msra.mxu0 0.0
        %536 = vmatprep.subr.mxu0 0.0
        %537 = vmatpush1.msra.mxu0 0.0
        %538 = vmatprep.subr.mxu0 0.0
        %539 = vmatpush1.msra.mxu0 0.0
        %540 = vmatprep.subr.mxu0 0.0
        %541 = vmatpush1.msra.mxu0 0.0
        %542 = vmatprep.subr.mxu0 0.0
        %543 = vmatpush1.msra.mxu0 0.0
        %544 = vmatprep.subr.mxu0 0.0
        %545 = vmatpush1.msra.mxu0 0.0
        %546 = vmatprep.subr.mxu0 0.0
        %547 = vmatpush1.msra.mxu0 0.0
        %548 = vmatprep.subr.mxu0 0.0
        %549 = vmatpush1.msra.mxu0 0.0
        %550 = vmatprep.subr.mxu0 0.0
        %551 = vmatpush1.msra.mxu0 0.0
        %552 = vmatprep.subr.mxu0 0.0
        %553 = vmatpush1.msra.mxu0 0.0
        %554 = vmatprep.subr.mxu0 0.0
        %555 = vmatpush1.msra.mxu0 0.0
        %556 = vmatprep.subr.mxu0 0.0
        %557 = vmatpush1.msra.mxu0 0.0
        %558 = vmatprep.subr.mxu0 0.0
        %559 = vmatpush1.msra.mxu0 0.0
        %560 = vmatprep.subr.mxu0 0.0
        %561 = vmatpush1.msra.mxu0 0.0
        %562 = vmatprep.subr.mxu0 0.0
        %563 = vmatpush1.msra.mxu0 0.0
        %564 = vmatprep.subr.mxu0 0.0
        %565 = vmatpush1.msra.mxu0 0.0
        %566 = vmatprep.subr.mxu0 0.0
        %567 = vmatpush1.msra.mxu0 0.0
        %568 = vmatprep.subr.mxu0 0.0
        %569 = vmatpush1.msra.mxu0 0.0
        %570 = vmatprep.subr.mxu0 0.0
        %571 = vmatpush1.msra.mxu0 0.0
        %572 = vmatprep.subr.mxu0 0.0
        %573 = vmatpush1.msra.mxu0 0.0
        %574 = vmatprep.subr.mxu0 0.0
        %575 = vmatpush1.msra.mxu0 0.0
        %576 = vmatprep.subr.mxu0 0.0
        %577 = vmatpush1.msra.mxu0 0.0
        %578 = vmatprep.mubr.f32.mxu0 0.0
        %579 = vmatmul.mubr.f32.gmra.mrb[0].mxu0 %v491
        %v580 = vpop.f32.mrb[0].mxu0
        %v581 = vadd.f32 0.0, %v580
        %v582 = vpop.f32.mrb[0].mxu0
        %583 = vmatprep.mubr.f32.mxu0 0.0
        %584 = vmatmul.mubr.f32.gmra.mrb[0].mxu0 %v494
        %v585 = vpop.f32.mrb[0].mxu0
        %v586 = vadd.f32 0.0, %v585
        %v587 = vpop.f32.mrb[0].mxu0
        %588 = vmatprep.mubr.f32.mxu0 0.0
        %589 = vmatmul.mubr.f32.gmra.mrb[0].mxu0 %v497
        %v590 = vpop.f32.mrb[0].mxu0
        %v591 = vadd.f32 0.0, %v590
        %v592 = vpop.f32.mrb[0].mxu0
        %593 = vmatprep.mubr.f32.mxu0 0.0
        %594 = vmatmul.mubr.f32.gmra.mrb[0].mxu0 %v500
        %v595 = vpop.f32.mrb[0].mxu0
        %v596 = vadd.f32 0.0, %v595
        %v597 = vpop.f32.mrb[0].mxu0
        %598 = vmatprep.mubr.f32.mxu0 0.0
        %599 = vmatmul.mubr.f32.gmra.mrb[0].mxu0 %v503
        %v600 = vpop.f32.mrb[0].mxu0
        %v601 = vadd.f32 0.0, %v600
        %v602 = vpop.f32.mrb[0].mxu0
        %603 = vmatprep.mubr.f32.mxu0 0.0
        %604 = vmatmul.mubr.f32.gmra.mrb[0].mxu0 %v506
        %v605 = vpop.f32.mrb[0].mxu0
        %v606 = vadd.f32 0.0, %v605
        %v607 = vpop.f32.mrb[0].mxu0
        %608 = vmatprep.mubr.f32.mxu0 0.0
        %609 = vmatmul.mubr.f32.gmra.mrb[0].mxu0 %v509
        %v610 = vpop.f32.mrb[0].mxu0
        %v611 = vadd.f32 0.0, %v610
        %v612 = vpop.f32.mrb[0].mxu0
        %613 = vmatprep.mubr.f32.mxu0 0.0
        %614 = vmatmul.mubr.f32.gmra.mrb[0].mxu0 %v512
        %v615 = vpop.f32.mrb[0].mxu0
        %v616 = vadd.f32 0.0, %v615
        %v617 = vpop.f32.mrb[0].mxu0
        %618 = vdwg.mxu0
        %v619 = vadd.f32 %v472, %v581
        %v620 = vadd.f32 %v473, %v586
        %v621 = vadd.f32 %v474, %v591
        %v622 = vadd.f32 %v475, %v596
        %v623 = vadd.f32 %v476, %v601
        %v624 = vadd.f32 %v477, %v606
        %v625 = vadd.f32 %v478, %v611
        %v626 = vadd.f32 %v479, %v616
        %627 = vst [vmem:[%s321] sm:$0xff] %v619
        %628 = vst [vmem:[%s321 + $0x8] sm:$0xff] %v620
        %629 = vst [vmem:[%s321 + $0x10] sm:$0xff] %v621
        %630 = vst [vmem:[%s321 + $0x18] sm:$0xff] %v622
        %631 = vst [vmem:[%s321 + $0x20] sm:$0xff] %v623
        %632 = vst [vmem:[%s321 + $0x28] sm:$0xff] %v624
        %633 = vst [vmem:[%s321 + $0x30] sm:$0xff] %v625
        %634 = vst [vmem:[%s321 + $0x38] sm:$0xff] %v626
        %s635 = sand.u32 %s149, 1
        %s636 = scalar_lea.sflag [#allocation4], %s635
        %s637 = sand.u32 %s149, 1
        %s638 = smul.addr %s637, 64
        %s639 = scalar_lea.vmem [#allocation11], %s638
        // Predicated region
        $region61: #{tpu_custom_call.1} parent=39 // pred_check
          %p640 = pneg %p159
        $region62: #{tpu_custom_call.1} parent=39 // pred_check_branch
          %642 = sbr.rel (%p640) target = $region64
        $region63: #{tpu_custom_call.1} parent=39 // pred_region
          %s643 = smul.u32 8, %s26
          %s645 = ssub.s32 1024, 1024
          %646 = vsyncadd %s636, %s645
          %s647 = smul.addr %s643, 128
          %s648 = scalar_lea.hbm %s5, %s647
          %s649 = sshll.u32 %s639, 4
          %s650 = int_to_ptr.vmem [resolvable:$true] %s649
          %655 = dma.vmem_to_hbm [thread:$0]  %s650, 1024, %s648, %s636, 128, 128, 8
        $region64: #{tpu_custom_call.1} parent=39 // pred_fallthru
          _
      $region40: #{tpu_custom_call.1} parent=5 // pred_fallthru
        _
      %p656 = scmp.le.s32.totalorder 2, %s21
      // Predicated region
      $region65: #{tpu_custom_call.1} parent=5 // pred_check
        %p657 = pneg %p656
      $region66: #{tpu_custom_call.1} parent=5 // pred_check_branch
        %659 = sbr.rel (%p657) target = $region68
      $region67: #{tpu_custom_call.1} parent=5 // pred_region
        %s660 = ssub.s32 %s21, 2
        // Predicated region
        $region69: #{tpu_custom_call.1} parent=67 // pred_check
          %p661 = pneg %p165
        $region70: #{tpu_custom_call.1} parent=67 // pred_check_branch
          %663 = sbr.rel (%p661) target = $region72
        $region71: #{tpu_custom_call.1} parent=67 // pred_region
          %s664 = sand.u32 %s150, 1
          %s665 = scalar_lea.sflag [#allocation4], %s664
          %s666 = sand.u32 %s150, 1
          %s667 = smul.addr %s666, 64
          %s668 = scalar_lea.vmem [#allocation11], %s667
          %669 = dma.done %s665, 1024
        $region72: #{tpu_custom_call.1} parent=67 // pred_fallthru
          _
      $region68: #{tpu_custom_call.1} parent=5 // pred_fallthru
        _
    $region6: #{tpu_custom_call.1} parent=1 // loop_footer
      %s25 = sadd.s32 1, %s21
    $region7: #{tpu_custom_call.1} parent=1 // loop_footer_branch
      %20 = sbr.rel target = $region3
    $region8: #{tpu_custom_call.1} parent=1 // loop_exit
      _
    %670 = vsyncpa [#allocation3], 1
    %s671 = scalar_lea.sflag [#allocation3], 1
    %672 = vsyncpa %s671, 1
    %673 = vsyncpa [#allocation6], 1
    %s674 = scalar_lea.sflag [#allocation6], 1
    %675 = vsyncpa %s674, 1
    %676 = vsyncpa [#allocation9], 1
    %677 = vsyncpa [#allocation4], 1
    %s678 = scalar_lea.sflag [#allocation4], 1
    %679 = vsyncpa %s678, 1

</llo_original>
